<compile_context>
chip_gen: v6e
topology: v6e:2x2x1
jax: 0.10.0
libtpu: 0.0.40
codegen_flags: <defaults>
</compile_context>

<pallas_src>
import math
from functools import partial

import jax
import jax.numpy as jnp
from jax.experimental import pallas as pl
from jax.experimental.pallas import tpu as pltpu


def _byte_sum_kernel(x_ref, o_ref, *, num_bytes, hidden):
    # x_ref: (tile_m, num_bytes * hidden) VMEM tile; o_ref: (tile_m, hidden).
    x = x_ref[...]
    acc = x[:, 0:hidden].astype(jnp.float32)          # f32 accumulation
    for k in range(1, num_bytes):
        acc = acc + x[:, k * hidden:(k + 1) * hidden].astype(jnp.float32)
    o_ref[...] = acc.astype(o_ref.dtype)


def byte_combine_sum(x, tile_m=None, vmem_budget_bytes=4 * 1024 * 1024):
    """sum over dim=-2 of x with shape (..., K, H)."""
    *lead, K, H = x.shape
    M = math.prod(lead) if lead else 1
    KH = K * H
    itemsize = jnp.dtype(x.dtype).itemsize
    sublane = {4: 8, 2: 16, 1: 32}.get(itemsize, 8)

    # Free, contiguous view: the trailing (K, H) dims fold into one lane axis.
    x2d = x.reshape(M, KH)

    if tile_m is None:
        row_bytes = max(1, KH * itemsize)
        budget_rows = max(sublane,
                          (vmem_budget_bytes // row_bytes) // sublane * sublane)
        # Keep >= 2 grid steps whenever possible so "parallel" over M can be
        # split across the 2 TensorCores on v7x.
        half_m = ((pl.cdiv(M, 2) + sublane - 1) // sublane) * sublane
        tile_m = min(budget_rows, half_m)
    if tile_m >= M:
        tile_m = M                                     # full extent: always legal
    else:
        tile_m = max(sublane, (tile_m // sublane) * sublane)

    grid_m = pl.cdiv(M, tile_m)

    # Double-buffered input + output blocks, plus headroom; cap at v7x VMEM.
    block_bytes = tile_m * (KH + H) * itemsize
    vmem_limit = int(min(64 * 1024 * 1024,
                         max(4 * block_bytes, 8 * 1024 * 1024)))

    out = pl.pallas_call(
        partial(_byte_sum_kernel, num_bytes=K, hidden=H),
        out_shape=jax.ShapeDtypeStruct((M, H), x.dtype),
        grid_spec=pltpu.PrefetchScalarGridSpec(
            num_scalar_prefetch=0,
            grid=(grid_m,),
            in_specs=[
                # Lane-dense input blocks; last dim equals the full array dim.
                pl.BlockSpec((tile_m, KH), lambda i: (i, 0)),
            ],
            out_specs=pl.BlockSpec((tile_m, H), lambda i: (i, 0)),
        ),
        compiler_params=pltpu.CompilerParams(
            dimension_semantics=("parallel",),
            vmem_limit_bytes=vmem_limit,
        ),
    )(x2d)

    return out.reshape(*lead, H)


if __name__ == "__main__":
    # Shapes implied by the byte-combine forward:
    # batch=2, seq=8, bytes-per-token=4, hidden=32
    key = jax.random.PRNGKey(0)
    x = jax.random.normal(key, (2, 8, 4, 32), dtype=jnp.float32)

    y = byte_combine_sum(x)
    jax.block_until_ready(y)
    y_ref = jnp.sum(x, axis=-2)          # == torch.sum(x, dim=-2)
    assert y.shape == y_ref.shape == (2, 8, 32)
    assert jnp.allclose(y, y_ref, atol=1e-5), "mismatch vs reference"

    # Partial-tile check: M = 15 does not divide tile_m; the ragged last
    # block's garbage rows must be masked on write.
    x2 = jax.random.normal(jax.random.PRNGKey(1), (3, 5, 4, 32),
                           dtype=jnp.float32)
    y2 = byte_combine_sum(x2)
    jax.block_until_ready(y2)
    assert jnp.allclose(y2, jnp.sum(x2, axis=-2), atol=1e-5), \
        "partial-tile mismatch"

    # bf16 input exercises the f32 accumulation path.
    x3 = jax.random.normal(jax.random.PRNGKey(2), (2, 8, 4, 32)).astype(
        jnp.bfloat16)
    y3 = byte_combine_sum(x3)
    jax.block_until_ready(y3)
    assert jnp.allclose(y3.astype(jnp.float32),
                        jnp.sum(x3.astype(jnp.float32), axis=-2),
                        atol=2e-2, rtol=2e-2), "bf16 mismatch"

    print("KERNEL_OK")
</pallas_src>

<mosaic_0001>
module attributes {stable_mosaic.version = 11 : i64} {
  func.func @_byte_sum_kernel(%arg0: i32, %arg1: memref<8x128xf32, #tpu.memory_space<vmem>>, %arg2: memref<8x32xf32, #tpu.memory_space<vmem>>) attributes {dimension_semantics = [#tpu.dimension_semantics<parallel>], iteration_bounds = array<i64: 2>, scalar_prefetch = 0 : i64, scratch_operands = 0 : i64, tpu.core_type = #tpu.core_type<tc>, window_params = [{transform_indices = @transform_0, window_bounds = array<i64: 8, 128>}, {transform_indices = @transform_1, window_bounds = array<i64: 8, 32>}]} {
    %c0 = arith.constant 0 : index
    %c0_0 = arith.constant 0 : index
    %0 = vector.load %arg1[%c0, %c0_0] : memref<8x128xf32, #tpu.memory_space<vmem>>, vector<8x128xf32>
    %1 = vector.extract_strided_slice %0 {offsets = [0, 0], sizes = [8, 32], strides = [1, 1]} : vector<8x128xf32> to vector<8x32xf32>
    %2 = vector.extract_strided_slice %0 {offsets = [0, 32], sizes = [8, 32], strides = [1, 1]} : vector<8x128xf32> to vector<8x32xf32>
    %3 = arith.addf %1, %2 : vector<8x32xf32>
    %4 = vector.extract_strided_slice %0 {offsets = [0, 64], sizes = [8, 32], strides = [1, 1]} : vector<8x128xf32> to vector<8x32xf32>
    %5 = arith.addf %3, %4 : vector<8x32xf32>
    %6 = vector.extract_strided_slice %0 {offsets = [0, 96], sizes = [8, 32], strides = [1, 1]} : vector<8x128xf32> to vector<8x32xf32>
    %7 = arith.addf %5, %6 : vector<8x32xf32>
    %c0_1 = arith.constant 0 : index
    %c0_2 = arith.constant 0 : index
    %8 = vector.load %arg2[%c0_1, %c0_2] : memref<8x32xf32, #tpu.memory_space<vmem>>, vector<8x32xf32>
    tpu.vector_store %arg2[%c0_1, %c0_2], %7 {strides = array<i32>} : memref<8x32xf32, #tpu.memory_space<vmem>>, vector<8x32xf32>,
    return
  }
  func.func @transform_0(%arg0: i32) -> (i32, i32) {
    %c0_i32 = arith.constant 0 : i32
    %c0_i32_0 = arith.constant 0 : i32
    return %arg0, %c0_i32 : i32, i32
  }
  func.func @transform_1(%arg0: i32) -> (i32, i32) {
    %c0_i32 = arith.constant 0 : i32
    %c0_i32_0 = arith.constant 0 : i32
    return %arg0, %c0_i32 : i32, i32
  }
}

</mosaic_0001>

<llo_original>
// kernel: tpu_custom_call.1
$region0: #{tpu_custom_call.1}
  #allocation0 [shape = 'u32[]', space=smem, size = 0x4, offset = 0x4, fixed_abs, tag = 'smem constant byte address 0x4 - core index']
  #allocation1 [shape = 'u32[144,128]{1,0:T(1,128)}', space=vmem, size = 0x12000, scoped, tag = 'internal scratch']
  %s0 = inlined_call_operand.hbm [shape: f32[16,128], index: 0, kind: input, shape index: {}]
  %s1 = inlined_call_operand.hbm [shape: f32[16,32], index: 1, kind: output, shape index: {}]
  %s2 = sld [smem:[#allocation0]]
  $region41: #{tpu_custom_call.1} parent=0
    _
  %s4 = ssub.s32 1, %s2
  %s5 = scalar_select 0, %s4, %s2
  $region1: #{tpu_custom_call.1} parent=0
    #allocation2 [shape = 'u8[8192]{0}', space=vmem, size = 0x2000, scoped, tag = 'input window, operand 0']
    #allocation3 [shape = 's32[2]{0}', space=sflag, size = 0x8, scoped, tag = 'scoped memory for tpu_custom_call.1']
    #allocation4 [shape = 's32[2]{0}', space=sflag, size = 0x8, scoped, tag = 'scoped memory for tpu_custom_call.1']
    #allocation5 [shape = 'u8[8192]{0}', space=vmem, size = 0x2000, scoped, tag = 'output window, operand 0']
    %6 = vsyncpa [#allocation3], 0
    %s7 = scalar_lea.sflag [#allocation3], 1
    %8 = vsyncpa %s7, 0
    %9 = vsyncpa [#allocation4], 0
    %s10 = scalar_lea.sflag [#allocation4], 1
    %11 = vsyncpa %s10, 0
    loop: start=0, step=1, limit=4
    $region2: #{tpu_custom_call.1} parent=1 // loop_pre_header
      _
    $region3: #{tpu_custom_call.1} parent=1 // loop_header
      %s13 = sphi 0, %s17
      %p14 = scmp.ge.s32.totalorder %s13, 4
      %s23 = sphi 0, %s25
      %s26 = sphi 0, %s23
      %s27 = sphi 0, %s26
      %s43 = sphi 0, %s27
      %s49 = sphi 0, %s51
      %s52 = sphi 0, %s49
      %s53 = sphi 0, %s52
      %s69 = sphi 0, %s53
    $region4: #{tpu_custom_call.1} parent=1 // loop_header_branch
      %16 = sbr.rel (%p14) target = $region8
    $region5: #{tpu_custom_call.1} parent=1 // loop_body
      %s18 = ssub.s32 %s13, 1
      %s19 = ssub.s32 %s13, 2
      %s20 = sadd.s32 %s13, 1
      %s21 = ssub.s32 %s13, %s20
      %p22 = scmp.eq.s32.totalorder %s21, 0
      %s24 = sadd.s32 %s23, 1
      %s25 = scalar_select %p22, %s23, %s24
      %p28 = pneg %p22
      %p29 = scmp.eq.s32.totalorder %s13, 1
      %p30 = por %p28, %p29
      %p31 = scmp.ne.s32.totalorder %s23, %s26
      %p32 = scmp.eq.s32.totalorder %s13, 0
      %p33 = por %p31, %p32
      %p34 = scmp.ne.s32.totalorder %s23, %s26
      %p35 = scmp.eq.s32.totalorder %s18, 1
      %p36 = por %p34, %p35
      %p37 = scmp.ne.s32.totalorder %s26, %s27
      %p38 = scmp.eq.s32.totalorder %s18, 0
      %p39 = por %p37, %p38
      %p40 = scmp.ne.s32.totalorder %s26, %s27
      %p41 = scmp.eq.s32.totalorder %s19, 1
      %p42 = por %p40, %p41
      %p44 = scmp.ne.s32.totalorder %s27, %s43
      %p45 = scmp.eq.s32.totalorder %s19, 0
      %p46 = por %p44, %p45
      %s47 = ssub.s32 %s13, %s20
      %p48 = scmp.eq.s32.totalorder %s47, 0
      %s50 = sadd.s32 %s49, 1
      %s51 = scalar_select %p48, %s49, %s50
      %p54 = pneg %p48
      %p55 = scmp.eq.s32.totalorder %s13, 1
      %p56 = por %p54, %p55
      %p57 = scmp.ne.s32.totalorder %s49, %s52
      %p58 = scmp.eq.s32.totalorder %s13, 0
      %p59 = por %p57, %p58
      %p60 = scmp.ne.s32.totalorder %s49, %s52
      %p61 = scmp.eq.s32.totalorder %s18, 1
      %p62 = por %p60, %p61
      %p63 = scmp.ne.s32.totalorder %s52, %s53
      %p64 = scmp.eq.s32.totalorder %s18, 0
      %p65 = por %p63, %p64
      %p66 = scmp.ne.s32.totalorder %s52, %s53
      %p67 = scmp.eq.s32.totalorder %s19, 1
      %p68 = por %p66, %p67
      %p70 = scmp.ne.s32.totalorder %s53, %s69
      %p71 = scmp.eq.s32.totalorder %s19, 0
      %p72 = por %p70, %p71
      %p73 = scmp.le.s32.totalorder 1, %s13
      %p74 = scmp.lt.s32.totalorder %s13, 3
      %p75 = pnand %p73, %p74
      %p76 = pneg %p75
      // Predicated region
      $region9: #{tpu_custom_call.1} parent=5 // pred_check
        _
      $region10: #{tpu_custom_call.1} parent=5 // pred_check_branch
        %78 = sbr.rel (%p75) target = $region12
      $region11: #{tpu_custom_call.1} parent=5 // pred_region
        %s79 = ssub.s32 %s13, 1
      $region12: #{tpu_custom_call.1} parent=5 // pred_fallthru
        _
      %p80 = scmp.lt.s32.totalorder %s13, 2
      // Predicated region
      $region13: #{tpu_custom_call.1} parent=5 // pred_check
        %p81 = pneg %p80
      $region14: #{tpu_custom_call.1} parent=5 // pred_check_branch
        %83 = sbr.rel (%p81) target = $region16
      $region15: #{tpu_custom_call.1} parent=5 // pred_region
        // Predicated region
        $region17: #{tpu_custom_call.1} parent=15 // pred_check
          %p84 = pneg %p33
        $region18: #{tpu_custom_call.1} parent=15 // pred_check_branch
          %86 = sbr.rel (%p84) target = $region20
        $region19: #{tpu_custom_call.1} parent=15 // pred_region
          %s87 = sand.u32 %s23, 1
          %s88 = scalar_lea.sflag [#allocation3], %s87
          %s89 = sand.u32 %s23, 1
          %s90 = smul.addr %s89, 8
          %s91 = scalar_lea.vmem [#allocation2], %s90
          %s93 = ssub.s32 128, 128
          %94 = vsyncadd %s88, %s93
          %s95 = smul.addr %s13, 128
          %s96 = scalar_lea.hbm %s0, %s95
          %s98 = sshll.u32 %s91, 4
          %s99 = int_to_ptr.vmem [resolvable:$true] %s98
          %101 = dma.hbm_to_vmem [thread:$0]  %s96, 128, %s99, %s88
        $region20: #{tpu_custom_call.1} parent=15 // pred_fallthru
          _
      $region16: #{tpu_custom_call.1} parent=5 // pred_fallthru
        _
      %p102 = scmp.le.s32.totalorder 1, %s13
      %p103 = scmp.lt.s32.totalorder %s13, 3
      %p104 = pnand %p102, %p103
      %p105 = pneg %p104
      // Predicated region
      $region21: #{tpu_custom_call.1} parent=5 // pred_check
        _
      $region22: #{tpu_custom_call.1} parent=5 // pred_check_branch
        %107 = sbr.rel (%p104) target = $region24
      $region23: #{tpu_custom_call.1} parent=5 // pred_region
        %s108 = ssub.s32 %s13, 1
        %s109 = sand.u32 %s26, 1
        %s110 = scalar_lea.sflag [#allocation3], %s109
        %s111 = sand.u32 %s26, 1
        %s112 = smul.addr %s111, 8
        %s113 = scalar_lea.vmem [#allocation2], %s112
        // Predicated region
        $region25: #{tpu_custom_call.1} parent=23 // pred_check
          %p114 = pneg %p39
        $region26: #{tpu_custom_call.1} parent=23 // pred_check_branch
          %116 = sbr.rel (%p114) target = $region28
        $region27: #{tpu_custom_call.1} parent=23 // pred_region
          %117 = dma.done %s110, 128
        $region28: #{tpu_custom_call.1} parent=23 // pred_fallthru
          _
        %s118 = sand.u32 %s26, 1
        %s119 = scalar_lea.sflag [#allocation3], %s118
        %s120 = sand.u32 %s26, 1
        %s121 = smul.addr %s120, 8
        %s122 = scalar_lea.vmem [#allocation2], %s121
        %p123 = pneg %p39
        %p124 = pneg %p36
        %p125 = pneg %p65
        %p126 = pneg %p62
        %s127 = sand.u32 %s52, 1
        %s128 = scalar_lea.sflag [#allocation4], %s127
        %s129 = sand.u32 %s52, 1
        %s130 = smul.addr %s129, 8
        %s131 = scalar_lea.vmem [#allocation5], %s130
        %v132 = vld [vmem:[%s113] sm:$0xff]
        %134 = vrot.lane.b32.xlu0 %v132, 96
        %v135 = vpop.permute.xlu0 %134
        %v137 = vadd.f32 %v132, %v135
        %138 = vrot.lane.b32.xlu0 %v132, 64
        %v139 = vpop.permute.xlu0 %138
        %v141 = vadd.f32 %v137, %v139
        %142 = vrot.lane.b32.xlu0 %v132, 32
        %v143 = vpop.permute.xlu0 %142
        %v145 = vadd.f32 %v141, %v143
        %vm146 = vcmask 261120
        %147 = vst.msk [vmem:[%s131] sm:$0xff] %vm146, %v145
        %s148 = sand.u32 %s52, 1
        %s149 = scalar_lea.sflag [#allocation4], %s148
        %s150 = sand.u32 %s52, 1
        %s151 = smul.addr %s150, 8
        %s152 = scalar_lea.vmem [#allocation5], %s151
        // Predicated region
        $region29: #{tpu_custom_call.1} parent=23 // pred_check
          %p153 = pneg %p62
        $region30: #{tpu_custom_call.1} parent=23 // pred_check_branch
          %155 = sbr.rel (%p153) target = $region32
        $region31: #{tpu_custom_call.1} parent=23 // pred_region
          %s157 = ssub.s32 128, 128
          %158 = vsyncadd %s149, %s157
          %s159 = smul.addr %s18, 128
          %s160 = scalar_lea.hbm %s1, %s159
          %s162 = sshll.u32 %s152, 4
          %s163 = int_to_ptr.vmem [resolvable:$true] %s162
          %165 = dma.vmem_to_hbm [thread:$0]  %s163, 128, %s160, %s149
        $region32: #{tpu_custom_call.1} parent=23 // pred_fallthru
          _
      $region24: #{tpu_custom_call.1} parent=5 // pred_fallthru
        _
      %p166 = scmp.le.s32.totalorder 2, %s13
      // Predicated region
      $region33: #{tpu_custom_call.1} parent=5 // pred_check
        %p167 = pneg %p166
      $region34: #{tpu_custom_call.1} parent=5 // pred_check_branch
        %169 = sbr.rel (%p167) target = $region36
      $region35: #{tpu_custom_call.1} parent=5 // pred_region
        %s170 = ssub.s32 %s13, 2
        // Predicated region
        $region37: #{tpu_custom_call.1} parent=35 // pred_check
          %p171 = pneg %p68
        $region38: #{tpu_custom_call.1} parent=35 // pred_check_branch
          %173 = sbr.rel (%p171) target = $region40
        $region39: #{tpu_custom_call.1} parent=35 // pred_region
          %s174 = sand.u32 %s53, 1
          %s175 = scalar_lea.sflag [#allocation4], %s174
          %s176 = sand.u32 %s53, 1
          %s177 = smul.addr %s176, 8
          %s178 = scalar_lea.vmem [#allocation5], %s177
          %179 = dma.done %s175, 128
        $region40: #{tpu_custom_call.1} parent=35 // pred_fallthru
          _
      $region36: #{tpu_custom_call.1} parent=5 // pred_fallthru
        _
    $region6: #{tpu_custom_call.1} parent=1 // loop_footer
      %s17 = sadd.s32 1, %s13
    $region7: #{tpu_custom_call.1} parent=1 // loop_footer_branch
      %12 = sbr.rel target = $region3
    $region8: #{tpu_custom_call.1} parent=1 // loop_exit
      _
    %180 = vsyncpa [#allocation3], 1
    %s181 = scalar_lea.sflag [#allocation3], 1
    %182 = vsyncpa %s181, 1
    %183 = vsyncpa [#allocation4], 1
    %s184 = scalar_lea.sflag [#allocation4], 1
    %185 = vsyncpa %s184, 1

</llo_original>
